<compile_context>
chip_gen: v5e
topology: v5e:2x2
jax: 0.10.0
libtpu: 0.0.40
codegen_flags: <defaults>
</compile_context>

<pallas_src>
import numpy as np
import jax
import jax.numpy as jnp
from jax.experimental import pallas as pl
from jax.experimental.pallas import tpu as pltpu


# ----------------------------- schedule (host, float64, matches torch) -------
def cosine_beta_schedule(timesteps, s=0.008):
    steps = timesteps + 1
    x = np.linspace(0, timesteps, steps, dtype=np.float64)
    alphas_cumprod = np.cos((x / timesteps + s) / (1 + s) * np.pi * 0.5) ** 2
    alphas_cumprod = alphas_cumprod / alphas_cumprod[0]
    betas = 1 - alphas_cumprod[1:] / alphas_cumprod[:-1]
    return np.clip(betas, 0, 0.9999)


# ----------------------------- tiling constants -------------------------------
# Largest lane tile per grid step.  An (8-sublane padded, 64K-lane) f32 block is
# 2 MiB; double-buffered x + noise + pred_x0 ~= 12.6 MiB of VMEM, which fits the
# scoped VMEM limit on v5e/v6e/v7x with ample headroom (v7x physical = 64 MiB).
_MAX_TILE_N = 64 * 1024
_SUB = 8
_LANE = 128


# ----------------------------- Pallas kernel ---------------------------------
def _make_diffusion_kernel(C, tile_n, n_valid, needs_mask):
    def kernel(coefs_ref, w_ref, bias_ref, x_ref, noise_ref, pred_x0_ref, l1_ref):
        b = pl.program_id(0)
        j = pl.program_id(1)

        sqrt_ac = coefs_ref[b, 0]     # sqrt(alphas_cumprod[t_b])
        sqrt_1mac = coefs_ref[b, 1]   # sqrt(1 - alphas_cumprod[t_b])
        sqrt_rac = coefs_ref[b, 2]    # sqrt(1 / alphas_cumprod[t_b])
        sqrt_rm1 = coefs_ref[b, 3]    # sqrt(1 / alphas_cumprod[t_b] - 1)

        x = x_ref[0]                  # (C, tile_n)
        n = noise_ref[0]              # (C, tile_n)

        # q_sample
        x_noisy = sqrt_ac * x + sqrt_1mac * n

        # synthetic denoiser: per-pixel channel mixing (1x1x1 conv) + per-batch
        # bias, unrolled as broadcast FMAs on the VPU (W, bias are SMEM scalars).
        xc = [x_noisy[c:c + 1, :] for c in range(C)]          # each (1, tile_n)
        rows = []
        for o in range(C):
            r = xc[0] * w_ref[o, 0]
            for c in range(1, C):
                r = r + xc[c] * w_ref[o, c]
            rows.append(r + bias_ref[b, o])
        pred_noise = jnp.concatenate(rows, axis=0)            # (C, tile_n)

        # predict_start_from_noise + clip_denoised (s = 1.0)
        pred_x0 = sqrt_rac * x_noisy - sqrt_rm1 * pred_noise
        pred_x0_ref[0] = jnp.clip(pred_x0, -1.0, 1.0)

        # partial l1 loss for this (b, j) block (mean taken outside)
        diff = jnp.abs(n - pred_noise)
        if needs_mask:
            col = j * tile_n + jax.lax.broadcasted_iota(jnp.int32, (1, tile_n), 1)
            diff = jnp.where(col < n_valid, diff, 0.0)
        part = jnp.sum(diff, axis=1, keepdims=True)            # (C, 1)
        part = jnp.sum(part, axis=0, keepdims=True)            # (1, 1)
        # lane-dense writeback: broadcast the block partial to a full (8,128) tile
        l1_ref[0, 0] = jnp.broadcast_to(part, (_SUB, _LANE))

    return kernel


def _run_diffusion_kernel(coefs, W, full_bias, x_flat, noise_flat, tile_n, n_valid):
    B, C, N_pad = x_flat.shape
    NB = N_pad // tile_n
    needs_mask = (N_pad != n_valid)

    kernel = _make_diffusion_kernel(C, tile_n, n_valid, needs_mask)

    pred_x0, l1_partials = pl.pallas_call(
        kernel,
        out_shape=(jax.ShapeDtypeStruct((B, C, N_pad), jnp.float32),
                   jax.ShapeDtypeStruct((B, NB, _SUB, _LANE), jnp.float32)),
        grid_spec=pltpu.PrefetchScalarGridSpec(
            num_scalar_prefetch=0,
            grid=(B, NB),
            in_specs=[
                pl.BlockSpec(memory_space=pltpu.MemorySpace.SMEM),      # coefs (B, 4)
                pl.BlockSpec(memory_space=pltpu.MemorySpace.SMEM),      # W     (C, C)
                pl.BlockSpec(memory_space=pltpu.MemorySpace.SMEM),      # bias  (B, C)
                pl.BlockSpec((1, C, tile_n), lambda b, j: (b, 0, j)),   # x
                pl.BlockSpec((1, C, tile_n), lambda b, j: (b, 0, j)),   # noise
            ],
            out_specs=(
                pl.BlockSpec((1, C, tile_n), lambda b, j: (b, 0, j)),          # pred_x0
                pl.BlockSpec((1, 1, _SUB, _LANE), lambda b, j: (b, j, 0, 0)),  # l1
            ),
        ),
        compiler_params=pltpu.CompilerParams(
            dimension_semantics=("parallel", "parallel"),
            vmem_limit_bytes=32 * 1024 * 1024),
    )(coefs, W, full_bias, x_flat, noise_flat)
    return pred_x0, l1_partials


# ----------------------------- module-equivalent wrapper ---------------------
class GaussianDiffusionPallas:
    def __init__(self, *, image_size, num_frames, channels=4, timesteps=1000,
                 loss_type='l1', seed=0):
        assert loss_type == 'l1'
        self.channels = channels
        self.image_size = image_size
        self.num_frames = num_frames
        self.num_timesteps = int(timesteps)

        betas = cosine_beta_schedule(timesteps)
        alphas = 1.0 - betas
        ac = np.cumprod(alphas)
        self.sqrt_alphas_cumprod = jnp.asarray(np.sqrt(ac), jnp.float32)
        self.sqrt_one_minus_alphas_cumprod = jnp.asarray(np.sqrt(1.0 - ac), jnp.float32)
        self.sqrt_recip_alphas_cumprod = jnp.asarray(np.sqrt(1.0 / ac), jnp.float32)
        self.sqrt_recipm1_alphas_cumprod = jnp.asarray(np.sqrt(1.0 / ac - 1.0), jnp.float32)

        # deterministic synthetic denoiser parameters
        kw, kb, kc = jax.random.split(jax.random.PRNGKey(seed), 3)
        C = channels
        self.W = (0.1 * jax.random.normal(kw, (C, C))).astype(jnp.float32)
        self.bias = (0.05 * jax.random.normal(kb, (C,))).astype(jnp.float32)
        self.W_cond = (0.1 * jax.random.normal(kc, (C, C))).astype(jnp.float32)

    def forward(self, x_cond, x_pred, key):
        """Returns (loss, pred_x0), matching GaussianDiffusion.forward/p_losses."""
        B, C, Fp, H, W = x_pred.shape
        N = Fp * H * W

        kt, kn = jax.random.split(key)
        t = jax.random.randint(kt, (B,), 0, self.num_timesteps)
        noise = jax.random.normal(kn, x_pred.shape, dtype=jnp.float32)

        # per-batch diffusion coefficients gathered at t  (-> SMEM)
        coefs = jnp.stack([
            self.sqrt_alphas_cumprod[t],
            self.sqrt_one_minus_alphas_cumprod[t],
            self.sqrt_recip_alphas_cumprod[t],
            self.sqrt_recipm1_alphas_cumprod[t],
        ], axis=1).astype(jnp.float32)                        # (B, 4)

        # conditioning (cond_frames) folded into a per-batch channel bias (-> SMEM)
        cond_feat = jnp.mean(x_cond, axis=(2, 3, 4))          # (B, C)
        full_bias = (self.bias[None, :] + cond_feat @ self.W_cond.T)  # (B, C)
        full_bias = full_bias.astype(jnp.float32)

        # lane tiling: pad N to a multiple of 512, then to a multiple of the
        # chosen tile; never fall back to a single whole-N block.
        n_pad = ((N + 511) // 512) * 512
        tile_n = min(n_pad, _MAX_TILE_N)
        n_pad = ((n_pad + tile_n - 1) // tile_n) * tile_n

        x_flat = x_pred.reshape(B, C, N).astype(jnp.float32)
        n_flat = noise.reshape(B, C, N).astype(jnp.float32)
        if n_pad != N:
            pad = ((0, 0), (0, 0), (0, n_pad - N))
            x_flat = jnp.pad(x_flat, pad)
            n_flat = jnp.pad(n_flat, pad)

        pred_x0, l1_partials = _run_diffusion_kernel(
            coefs, self.W, full_bias, x_flat, n_flat, tile_n, N)

        loss = jnp.sum(l1_partials[:, :, 0, 0]) / (B * C * N)   # F.l1_loss (mean)
        pred_x0 = pred_x0[:, :, :N].reshape(B, C, Fp, H, W)
        return loss, pred_x0, (coefs, noise, full_bias)


# pure-JAX reference of the same math, for correctness checking
def _reference(x_pred, coefs, noise, W, full_bias):
    B, C, Fp, H, Wd = x_pred.shape
    N = Fp * H * Wd
    x = x_pred.reshape(B, C, N)
    n = noise.reshape(B, C, N)
    a = coefs[:, 0][:, None, None]
    b1 = coefs[:, 1][:, None, None]
    ra = coefs[:, 2][:, None, None]
    rm = coefs[:, 3][:, None, None]
    x_noisy = a * x + b1 * n
    pred_noise = jnp.einsum('oc,bcn->bon', W, x_noisy,
                            precision=jax.lax.Precision.HIGHEST) + full_bias[:, :, None]
    loss = jnp.mean(jnp.abs(n - pred_noise))
    pred_x0 = jnp.clip(ra * x_noisy - rm * pred_noise, -1.0, 1.0)
    return loss, pred_x0.reshape(x_pred.shape)


if __name__ == "__main__":
    B, C, F_cond, F_pred, HW = 2, 4, 2, 4, 16

    model = GaussianDiffusionPallas(image_size=HW, num_frames=F_cond + F_pred,
                                    channels=C, timesteps=1000, seed=0)

    key = jax.random.PRNGKey(0)
    kc, kp, kf = jax.random.split(key, 3)
    x_cond = jax.random.normal(kc, (B, C, F_cond, HW, HW), dtype=jnp.float32)
    x_pred = jax.random.normal(kp, (B, C, F_pred, HW, HW), dtype=jnp.float32)

    loss, pred_x0, (coefs, noise, full_bias) = model.forward(x_cond, x_pred, kf)
    loss = jax.block_until_ready(loss)
    pred_x0 = jax.block_until_ready(pred_x0)

    # sanity check against pure-JAX reference
    ref_loss, ref_pred_x0 = _reference(x_pred, coefs, noise, model.W, full_bias)
    assert np.allclose(np.asarray(loss), np.asarray(ref_loss), rtol=1e-5, atol=1e-5)
    assert np.allclose(np.asarray(pred_x0), np.asarray(ref_pred_x0), rtol=1e-5, atol=1e-5)

    print("KERNEL_OK")
</pallas_src>

<mosaic_0001>
module attributes {stable_mosaic.version = 11 : i64} {
  func.func @kernel(%arg0: i32, %arg1: i32, %arg2: memref<2x4xf32, #tpu.memory_space<smem>>, %arg3: memref<4x4xf32, #tpu.memory_space<smem>>, %arg4: memref<2x4xf32, #tpu.memory_space<smem>>, %arg5: memref<1x4x1024xf32, #tpu.memory_space<vmem>>, %arg6: memref<1x4x1024xf32, #tpu.memory_space<vmem>>, %arg7: memref<1x4x1024xf32, #tpu.memory_space<vmem>>, %arg8: memref<1x1x8x128xf32, #tpu.memory_space<vmem>>) attributes {dimension_semantics = [#tpu.dimension_semantics<parallel>, #tpu.dimension_semantics<parallel>], iteration_bounds = array<i64: 2, 1>, scalar_prefetch = 0 : i64, scratch_operands = 0 : i64, tpu.core_type = #tpu.core_type<tc>, window_params = [{transform_indices = @transform_0, window_bounds = array<i64: 2, 4>}, {transform_indices = @transform_1, window_bounds = array<i64: 4, 4>}, {transform_indices = @transform_2, window_bounds = array<i64: 2, 4>}, {transform_indices = @transform_3, window_bounds = array<i64: 1, 4, 1024>}, {transform_indices = @transform_4, window_bounds = array<i64: 1, 4, 1024>}, {transform_indices = @transform_5, window_bounds = array<i64: 1, 4, 1024>}, {transform_indices = @transform_6, window_bounds = array<i64: 1, 1, 8, 128>}]} {
    %0 = arith.index_cast %arg0 : i32 to index
    %c0 = arith.constant 0 : index
    %1 = memref.load %arg2[%0, %c0] : memref<2x4xf32, #tpu.memory_space<smem>>
    %2 = arith.index_cast %arg0 : i32 to index
    %c1 = arith.constant 1 : index
    %3 = memref.load %arg2[%2, %c1] : memref<2x4xf32, #tpu.memory_space<smem>>
    %4 = arith.index_cast %arg0 : i32 to index
    %c2 = arith.constant 2 : index
    %5 = memref.load %arg2[%4, %c2] : memref<2x4xf32, #tpu.memory_space<smem>>
    %6 = arith.index_cast %arg0 : i32 to index
    %c3 = arith.constant 3 : index
    %7 = memref.load %arg2[%6, %c3] : memref<2x4xf32, #tpu.memory_space<smem>>
    %c0_0 = arith.constant 0 : index
    %c0_1 = arith.constant 0 : index
    %c0_2 = arith.constant 0 : index
    %8 = vector.load %arg5[%c0_0, %c0_1, %c0_2] : memref<1x4x1024xf32, #tpu.memory_space<vmem>>, vector<1x4x1024xf32>
    %9 = vector.shape_cast %8 : vector<1x4x1024xf32> to vector<4x1024xf32>
    %c0_3 = arith.constant 0 : index
    %c0_4 = arith.constant 0 : index
    %c0_5 = arith.constant 0 : index
    %10 = vector.load %arg6[%c0_3, %c0_4, %c0_5] : memref<1x4x1024xf32, #tpu.memory_space<vmem>>, vector<1x4x1024xf32>
    %11 = vector.shape_cast %10 : vector<1x4x1024xf32> to vector<4x1024xf32>
    %12 = vector.broadcast %1 : f32 to vector<4x1024xf32>
    %13 = arith.mulf %12, %9 : vector<4x1024xf32>
    %14 = vector.broadcast %3 : f32 to vector<4x1024xf32>
    %15 = arith.mulf %14, %11 : vector<4x1024xf32>
    %16 = arith.addf %13, %15 : vector<4x1024xf32>
    %17 = vector.extract_strided_slice %16 {offsets = [0, 0], sizes = [1, 1024], strides = [1, 1]} : vector<4x1024xf32> to vector<1x1024xf32>
    %18 = vector.extract_strided_slice %16 {offsets = [1, 0], sizes = [1, 1024], strides = [1, 1]} : vector<4x1024xf32> to vector<1x1024xf32>
    %19 = vector.extract_strided_slice %16 {offsets = [2, 0], sizes = [1, 1024], strides = [1, 1]} : vector<4x1024xf32> to vector<1x1024xf32>
    %20 = vector.extract_strided_slice %16 {offsets = [3, 0], sizes = [1, 1024], strides = [1, 1]} : vector<4x1024xf32> to vector<1x1024xf32>
    %c0_6 = arith.constant 0 : index
    %c0_7 = arith.constant 0 : index
    %21 = memref.load %arg3[%c0_6, %c0_7] : memref<4x4xf32, #tpu.memory_space<smem>>
    %22 = vector.broadcast %21 : f32 to vector<1x1024xf32>
    %23 = arith.mulf %17, %22 : vector<1x1024xf32>
    %c0_8 = arith.constant 0 : index
    %c1_9 = arith.constant 1 : index
    %24 = memref.load %arg3[%c0_8, %c1_9] : memref<4x4xf32, #tpu.memory_space<smem>>
    %25 = vector.broadcast %24 : f32 to vector<1x1024xf32>
    %26 = arith.mulf %18, %25 : vector<1x1024xf32>
    %27 = arith.addf %23, %26 : vector<1x1024xf32>
    %c0_10 = arith.constant 0 : index
    %c2_11 = arith.constant 2 : index
    %28 = memref.load %arg3[%c0_10, %c2_11] : memref<4x4xf32, #tpu.memory_space<smem>>
    %29 = vector.broadcast %28 : f32 to vector<1x1024xf32>
    %30 = arith.mulf %19, %29 : vector<1x1024xf32>
    %31 = arith.addf %27, %30 : vector<1x1024xf32>
    %c0_12 = arith.constant 0 : index
    %c3_13 = arith.constant 3 : index
    %32 = memref.load %arg3[%c0_12, %c3_13] : memref<4x4xf32, #tpu.memory_space<smem>>
    %33 = vector.broadcast %32 : f32 to vector<1x1024xf32>
    %34 = arith.mulf %20, %33 : vector<1x1024xf32>
    %35 = arith.addf %31, %34 : vector<1x1024xf32>
    %36 = arith.index_cast %arg0 : i32 to index
    %c0_14 = arith.constant 0 : index
    %37 = memref.load %arg4[%36, %c0_14] : memref<2x4xf32, #tpu.memory_space<smem>>
    %38 = vector.broadcast %37 : f32 to vector<1x1024xf32>
    %39 = arith.addf %35, %38 : vector<1x1024xf32>
    %c1_15 = arith.constant 1 : index
    %c0_16 = arith.constant 0 : index
    %40 = memref.load %arg3[%c1_15, %c0_16] : memref<4x4xf32, #tpu.memory_space<smem>>
    %41 = vector.broadcast %40 : f32 to vector<1x1024xf32>
    %42 = arith.mulf %17, %41 : vector<1x1024xf32>
    %c1_17 = arith.constant 1 : index
    %c1_18 = arith.constant 1 : index
    %43 = memref.load %arg3[%c1_17, %c1_18] : memref<4x4xf32, #tpu.memory_space<smem>>
    %44 = vector.broadcast %43 : f32 to vector<1x1024xf32>
    %45 = arith.mulf %18, %44 : vector<1x1024xf32>
    %46 = arith.addf %42, %45 : vector<1x1024xf32>
    %c1_19 = arith.constant 1 : index
    %c2_20 = arith.constant 2 : index
    %47 = memref.load %arg3[%c1_19, %c2_20] : memref<4x4xf32, #tpu.memory_space<smem>>
    %48 = vector.broadcast %47 : f32 to vector<1x1024xf32>
    %49 = arith.mulf %19, %48 : vector<1x1024xf32>
    %50 = arith.addf %46, %49 : vector<1x1024xf32>
    %c1_21 = arith.constant 1 : index
    %c3_22 = arith.constant 3 : index
    %51 = memref.load %arg3[%c1_21, %c3_22] : memref<4x4xf32, #tpu.memory_space<smem>>
    %52 = vector.broadcast %51 : f32 to vector<1x1024xf32>
    %53 = arith.mulf %20, %52 : vector<1x1024xf32>
    %54 = arith.addf %50, %53 : vector<1x1024xf32>
    %55 = arith.index_cast %arg0 : i32 to index
    %c1_23 = arith.constant 1 : index
    %56 = memref.load %arg4[%55, %c1_23] : memref<2x4xf32, #tpu.memory_space<smem>>
    %57 = vector.broadcast %56 : f32 to vector<1x1024xf32>
    %58 = arith.addf %54, %57 : vector<1x1024xf32>
    %c2_24 = arith.constant 2 : index
    %c0_25 = arith.constant 0 : index
    %59 = memref.load %arg3[%c2_24, %c0_25] : memref<4x4xf32, #tpu.memory_space<smem>>
    %60 = vector.broadcast %59 : f32 to vector<1x1024xf32>
    %61 = arith.mulf %17, %60 : vector<1x1024xf32>
    %c2_26 = arith.constant 2 : index
    %c1_27 = arith.constant 1 : index
    %62 = memref.load %arg3[%c2_26, %c1_27] : memref<4x4xf32, #tpu.memory_space<smem>>
    %63 = vector.broadcast %62 : f32 to vector<1x1024xf32>
    %64 = arith.mulf %18, %63 : vector<1x1024xf32>
    %65 = arith.addf %61, %64 : vector<1x1024xf32>
    %c2_28 = arith.constant 2 : index
    %c2_29 = arith.constant 2 : index
    %66 = memref.load %arg3[%c2_28, %c2_29] : memref<4x4xf32, #tpu.memory_space<smem>>
    %67 = vector.broadcast %66 : f32 to vector<1x1024xf32>
    %68 = arith.mulf %19, %67 : vector<1x1024xf32>
    %69 = arith.addf %65, %68 : vector<1x1024xf32>
    %c2_30 = arith.constant 2 : index
    %c3_31 = arith.constant 3 : index
    %70 = memref.load %arg3[%c2_30, %c3_31] : memref<4x4xf32, #tpu.memory_space<smem>>
    %71 = vector.broadcast %70 : f32 to vector<1x1024xf32>
    %72 = arith.mulf %20, %71 : vector<1x1024xf32>
    %73 = arith.addf %69, %72 : vector<1x1024xf32>
    %74 = arith.index_cast %arg0 : i32 to index
    %c2_32 = arith.constant 2 : index
    %75 = memref.load %arg4[%74, %c2_32] : memref<2x4xf32, #tpu.memory_space<smem>>
    %76 = vector.broadcast %75 : f32 to vector<1x1024xf32>
    %77 = arith.addf %73, %76 : vector<1x1024xf32>
    %c3_33 = arith.constant 3 : index
    %c0_34 = arith.constant 0 : index
    %78 = memref.load %arg3[%c3_33, %c0_34] : memref<4x4xf32, #tpu.memory_space<smem>>
    %79 = vector.broadcast %78 : f32 to vector<1x1024xf32>
    %80 = arith.mulf %17, %79 : vector<1x1024xf32>
    %c3_35 = arith.constant 3 : index
    %c1_36 = arith.constant 1 : index
    %81 = memref.load %arg3[%c3_35, %c1_36] : memref<4x4xf32, #tpu.memory_space<smem>>
    %82 = vector.broadcast %81 : f32 to vector<1x1024xf32>
    %83 = arith.mulf %18, %82 : vector<1x1024xf32>
    %84 = arith.addf %80, %83 : vector<1x1024xf32>
    %c3_37 = arith.constant 3 : index
    %c2_38 = arith.constant 2 : index
    %85 = memref.load %arg3[%c3_37, %c2_38] : memref<4x4xf32, #tpu.memory_space<smem>>
    %86 = vector.broadcast %85 : f32 to vector<1x1024xf32>
    %87 = arith.mulf %19, %86 : vector<1x1024xf32>
    %88 = arith.addf %84, %87 : vector<1x1024xf32>
    %c3_39 = arith.constant 3 : index
    %c3_40 = arith.constant 3 : index
    %89 = memref.load %arg3[%c3_39, %c3_40] : memref<4x4xf32, #tpu.memory_space<smem>>
    %90 = vector.broadcast %89 : f32 to vector<1x1024xf32>
    %91 = arith.mulf %20, %90 : vector<1x1024xf32>
    %92 = arith.addf %88, %91 : vector<1x1024xf32>
    %93 = arith.index_cast %arg0 : i32 to index
    %c3_41 = arith.constant 3 : index
    %94 = memref.load %arg4[%93, %c3_41] : memref<2x4xf32, #tpu.memory_space<smem>>
    %95 = vector.broadcast %94 : f32 to vector<1x1024xf32>
    %96 = arith.addf %92, %95 : vector<1x1024xf32>
    %97 = tpu.concatenate %39, %58, %77, %96 in 0 : vector<1x1024xf32>, vector<1x1024xf32>, vector<1x1024xf32>, vector<1x1024xf32> -> vector<4x1024xf32>
    %98 = vector.broadcast %5 : f32 to vector<4x1024xf32>
    %99 = arith.mulf %98, %16 : vector<4x1024xf32>
    %100 = vector.broadcast %7 : f32 to vector<4x1024xf32>
    %101 = arith.mulf %100, %97 : vector<4x1024xf32>
    %102 = arith.subf %99, %101 : vector<4x1024xf32>
    %cst = arith.constant -1.000000e+00 : f32
    %cst_42 = arith.constant 1.000000e+00 : f32
    %103 = vector.broadcast %cst : f32 to vector<4x1024xf32>
    %104 = arith.maximumf %103, %102 : vector<4x1024xf32>
    %105 = vector.broadcast %cst_42 : f32 to vector<4x1024xf32>
    %106 = arith.minimumf %105, %104 : vector<4x1024xf32>
    %c0_43 = arith.constant 0 : index
    %c0_44 = arith.constant 0 : index
    %c0_45 = arith.constant 0 : index
    %107 = vector.load %arg7[%c0_43, %c0_44, %c0_45] : memref<1x4x1024xf32, #tpu.memory_space<vmem>>, vector<1x4x1024xf32>
    %108 = vector.shape_cast %107 : vector<1x4x1024xf32> to vector<4x1024xf32>
    %109 = vector.shape_cast %106 : vector<4x1024xf32> to vector<1x4x1024xf32>
    tpu.vector_store %arg7[%c0_43, %c0_44, %c0_45], %109 {strides = array<i32>} : memref<1x4x1024xf32, #tpu.memory_space<vmem>>, vector<1x4x1024xf32>,
    %110 = arith.subf %11, %97 : vector<4x1024xf32>
    %111 = math.absf %110 : vector<4x1024xf32>
    %cst_46 = arith.constant dense<0.000000e+00> : vector<4xf32>
    %112 = vector.multi_reduction <add>, %111, %cst_46 [1] : vector<4x1024xf32> to vector<4xf32>
    %113 = vector.shape_cast %112 : vector<4xf32> to vector<4x1xf32>
    %cst_47 = arith.constant dense<0.000000e+00> : vector<1xf32>
    %114 = vector.multi_reduction <add>, %113, %cst_47 [0] : vector<4x1xf32> to vector<1xf32>
    %115 = vector.shape_cast %114 : vector<1xf32> to vector<1x1xf32>
    %116 = vector.shape_cast %115 : vector<1x1xf32> to vector<1x1xf32>
    %117 = vector.broadcast %116 : vector<1x1xf32> to vector<8x128xf32>
    %c0_48 = arith.constant 0 : index
    %c0_49 = arith.constant 0 : index
    %c0_50 = arith.constant 0 : index
    %c0_51 = arith.constant 0 : index
    %118 = vector.load %arg8[%c0_48, %c0_49, %c0_50, %c0_51] : memref<1x1x8x128xf32, #tpu.memory_space<vmem>>, vector<1x1x8x128xf32>
    %119 = vector.shape_cast %118 : vector<1x1x8x128xf32> to vector<8x128xf32>
    %120 = vector.shape_cast %117 : vector<8x128xf32> to vector<1x1x8x128xf32>
    tpu.vector_store %arg8[%c0_48, %c0_49, %c0_50, %c0_51], %120 {strides = array<i32>} : memref<1x1x8x128xf32, #tpu.memory_space<vmem>>, vector<1x1x8x128xf32>,
    return
  }
  func.func @transform_0(%arg0: i32, %arg1: i32) -> (i32, i32) {
    %c0_i32 = arith.constant 0 : i32
    %c0_i32_0 = arith.constant 0 : i32
    %c0_i32_1 = arith.constant 0 : i32
    return %c0_i32, %c0_i32_0 : i32, i32
  }
  func.func @transform_1(%arg0: i32, %arg1: i32) -> (i32, i32) {
    %c0_i32 = arith.constant 0 : i32
    %c0_i32_0 = arith.constant 0 : i32
    %c0_i32_1 = arith.constant 0 : i32
    return %c0_i32, %c0_i32_0 : i32, i32
  }
  func.func @transform_2(%arg0: i32, %arg1: i32) -> (i32, i32) {
    %c0_i32 = arith.constant 0 : i32
    %c0_i32_0 = arith.constant 0 : i32
    %c0_i32_1 = arith.constant 0 : i32
    return %c0_i32, %c0_i32_0 : i32, i32
  }
  func.func @transform_3(%arg0: i32, %arg1: i32) -> (i32, i32, i32) {
    %c0_i32 = arith.constant 0 : i32
    %c0_i32_0 = arith.constant 0 : i32
    return %arg0, %c0_i32, %arg1 : i32, i32, i32
  }
  func.func @transform_4(%arg0: i32, %arg1: i32) -> (i32, i32, i32) {
    %c0_i32 = arith.constant 0 : i32
    %c0_i32_0 = arith.constant 0 : i32
    return %arg0, %c0_i32, %arg1 : i32, i32, i32
  }
  func.func @transform_5(%arg0: i32, %arg1: i32) -> (i32, i32, i32) {
    %c0_i32 = arith.constant 0 : i32
    %c0_i32_0 = arith.constant 0 : i32
    return %arg0, %c0_i32, %arg1 : i32, i32, i32
  }
  func.func @transform_6(%arg0: i32, %arg1: i32) -> (i32, i32, i32, i32) {
    %c0_i32 = arith.constant 0 : i32
    %c0_i32_0 = arith.constant 0 : i32
    %c0_i32_1 = arith.constant 0 : i32
    return %arg0, %arg1, %c0_i32, %c0_i32_0 : i32, i32, i32, i32
  }
}

</mosaic_0001>

<llo_original>
// kernel: tpu_custom_call.1
$region0: #{tpu_custom_call.1}
  #allocation0 [shape = 'u32[]', space=smem, size = 0x4, offset = 0x4, fixed_abs, tag = 'smem constant byte address 0x4 - core index']
  #allocation1 [shape = 'u32[72,128]{1,0:T(1,128)}', space=vmem, size = 0x9000, scoped, tag = 'internal scratch']
  %s0 = inlined_call_operand.hbm [shape: f32[2,4], index: 0, kind: input, shape index: {}]
  %s1 = inlined_call_operand.hbm [shape: f32[4,4], index: 1, kind: input, shape index: {}]
  %s2 = inlined_call_operand.hbm [shape: f32[2,4], index: 2, kind: input, shape index: {}]
  %s3 = inlined_call_operand.hbm [shape: f32[2,4,1024], index: 3, kind: input, shape index: {}]
  %s4 = inlined_call_operand.hbm [shape: f32[2,4,1024], index: 4, kind: input, shape index: {}]
  %s5 = inlined_call_operand.hbm [shape: f32[2,4,1024], index: 5, kind: output, shape index: {0}]
  %s6 = inlined_call_operand.hbm [shape: f32[2,1,8,128], index: 6, kind: output, shape index: {1}]
  %7 = xla_tuple %s5, %s6
  %s8 = sld [smem:[#allocation0]]
  $region81: #{tpu_custom_call.1} parent=0
    _
  %s10 = ssub.s32 1, %s8
  %s11 = scalar_select 0, %s10, %s8
  $region1: #{tpu_custom_call.1} parent=0
    #allocation2 [shape = 'u8[1024]{0}', space=smem, size = 0x400, scoped, tag = 'input window, operand 0, single buffered']
    #allocation3 [shape = 's32[2]{0}', space=sflag, size = 0x8, scoped, tag = 'scoped memory for tpu_custom_call.1']
    #allocation4 [shape = 's32[2]{0}', space=sflag, size = 0x8, scoped, tag = 'scoped memory for tpu_custom_call.1']
    #allocation5 [shape = 's32[2]{0}', space=sflag, size = 0x8, scoped, tag = 'scoped memory for tpu_custom_call.1']
    #allocation6 [shape = 'u8[2048]{0}', space=smem, size = 0x800, scoped, tag = 'input window, operand 1, single buffered']
    #allocation7 [shape = 's32[1]{0}', space=sflag, size = 0x4, scoped, tag = 'scoped memory for tpu_custom_call.1']
    #allocation8 [shape = 'u8[1024]{0}', space=smem, size = 0x400, scoped, tag = 'input window, operand 2, single buffered']
    #allocation9 [shape = 'u8[32768]{0}', space=vmem, size = 0x8000, scoped, tag = 'input window, operand 3']
    #allocation10 [shape = 'u8[32768]{0}', space=vmem, size = 0x8000, scoped, tag = 'input window, operand 4']
    #allocation11 [shape = 's32[2]{0}', space=sflag, size = 0x8, scoped, tag = 'scoped memory for tpu_custom_call.1']
    #allocation12 [shape = 'u8[32768]{0}', space=vmem, size = 0x8000, scoped, tag = 'output window, operand 0']
    #allocation13 [shape = 'u8[8192]{0}', space=vmem, size = 0x2000, scoped, tag = 'output window, operand 1']
    #allocation14 [shape = 's32[2]{0}', space=sflag, size = 0x8, scoped, tag = 'scoped memory for tpu_custom_call.1']
    %12 = vsyncpa [#allocation5], 0
    %13 = vsyncpa [#allocation7], 0
    %14 = vsyncpa [#allocation3], 0
    %s15 = scalar_lea.sflag [#allocation3], 1
    %16 = vsyncpa %s15, 0
    %17 = vsyncpa [#allocation11], 0
    %s18 = scalar_lea.sflag [#allocation11], 1
    %19 = vsyncpa %s18, 0
    %20 = vsyncpa [#allocation4], 0
    %s21 = scalar_lea.sflag [#allocation4], 1
    %22 = vsyncpa %s21, 0
    %23 = vsyncpa [#allocation14], 0
    %s24 = scalar_lea.sflag [#allocation14], 1
    %25 = vsyncpa %s24, 0
    loop: start=0, step=1, limit=4
    $region2: #{tpu_custom_call.1} parent=1 // loop_pre_header
      _
    $region3: #{tpu_custom_call.1} parent=1 // loop_header
      %s27 = sphi 0, %s31
      %p28 = scmp.ge.s32.totalorder %s27, 4
      %s34 = sphi 0, %s46
      %s35 = sphi 0, %s42
      %s36 = sphi 0, %s34
      %s37 = sphi 0, %s35
      %s38 = sphi 0, %s36
      %s39 = sphi 0, %s37
      %s47 = sphi 0, %s47
      %s49 = sphi 0, %s47
      %s50 = sphi 0, %s49
      %s64 = sphi 0, %s50
      %s68 = sphi 0, %s68
      %s70 = sphi 0, %s68
      %s71 = sphi 0, %s70
      %s85 = sphi 0, %s71
      %s89 = sphi 0, %s89
      %s91 = sphi 0, %s89
      %s92 = sphi 0, %s91
      %s106 = sphi 0, %s92
      %s114 = sphi 0, %s116
      %s117 = sphi 0, %s114
      %s118 = sphi 0, %s117
      %s134 = sphi 0, %s118
      %s142 = sphi 0, %s144
      %s145 = sphi 0, %s142
      %s146 = sphi 0, %s145
      %s162 = sphi 0, %s146
      %s170 = sphi 0, %s172
      %s173 = sphi 0, %s170
      %s174 = sphi 0, %s173
      %s190 = sphi 0, %s174
      %s198 = sphi 0, %s200
      %s201 = sphi 0, %s198
      %s202 = sphi 0, %s201
      %s218 = sphi 0, %s202
    $region4: #{tpu_custom_call.1} parent=1 // loop_header_branch
      %30 = sbr.rel (%p28) target = $region8
    $region5: #{tpu_custom_call.1} parent=1 // loop_body
      %s32 = ssub.s32 %s27, 1
      %s33 = ssub.s32 %s27, 2
      %s40 = sadd.s32 1, %s35
      %p41 = scmp.ge.s32.totalorder %s40, 1
      %s42 = scalar_select %p41, 0, %s40
      %s43 = sadd.s32 1, %s34
      %s44 = scalar_select %p41, %s43, %s34
      %p45 = scmp.ge.s32.totalorder %s44, 2
      %s46 = scalar_select %p45, 0, %s44
      %s48 = sadd.s32 %s47, 1
      %p51 = scmp.eq.s32.totalorder %s27, 1
      %p52 = scmp.ne.s32.totalorder %s47, %s49
      %p53 = scmp.eq.s32.totalorder %s27, 0
      %p54 = por %p52, %p53
      %p55 = scmp.ne.s32.totalorder %s47, %s49
      %p56 = scmp.eq.s32.totalorder %s32, 1
      %p57 = por %p55, %p56
      %p58 = scmp.ne.s32.totalorder %s49, %s50
      %p59 = scmp.eq.s32.totalorder %s32, 0
      %p60 = por %p58, %p59
      %p61 = scmp.ne.s32.totalorder %s49, %s50
      %p62 = scmp.eq.s32.totalorder %s33, 1
      %p63 = por %p61, %p62
      %p65 = scmp.ne.s32.totalorder %s50, %s64
      %p66 = scmp.eq.s32.totalorder %s33, 0
      %p67 = por %p65, %p66
      %s69 = sadd.s32 %s68, 1
      %p72 = scmp.eq.s32.totalorder %s27, 1
      %p73 = scmp.ne.s32.totalorder %s68, %s70
      %p74 = scmp.eq.s32.totalorder %s27, 0
      %p75 = por %p73, %p74
      %p76 = scmp.ne.s32.totalorder %s68, %s70
      %p77 = scmp.eq.s32.totalorder %s32, 1
      %p78 = por %p76, %p77
      %p79 = scmp.ne.s32.totalorder %s70, %s71
      %p80 = scmp.eq.s32.totalorder %s32, 0
      %p81 = por %p79, %p80
      %p82 = scmp.ne.s32.totalorder %s70, %s71
      %p83 = scmp.eq.s32.totalorder %s33, 1
      %p84 = por %p82, %p83
      %p86 = scmp.ne.s32.totalorder %s71, %s85
      %p87 = scmp.eq.s32.totalorder %s33, 0
      %p88 = por %p86, %p87
      %s90 = sadd.s32 %s89, 1
      %p93 = scmp.eq.s32.totalorder %s27, 1
      %p94 = scmp.ne.s32.totalorder %s89, %s91
      %p95 = scmp.eq.s32.totalorder %s27, 0
      %p96 = por %p94, %p95
      %p97 = scmp.ne.s32.totalorder %s89, %s91
      %p98 = scmp.eq.s32.totalorder %s32, 1
      %p99 = por %p97, %p98
      %p100 = scmp.ne.s32.totalorder %s91, %s92
      %p101 = scmp.eq.s32.totalorder %s32, 0
      %p102 = por %p100, %p101
      %p103 = scmp.ne.s32.totalorder %s91, %s92
      %p104 = scmp.eq.s32.totalorder %s33, 1
      %p105 = por %p103, %p104
      %p107 = scmp.ne.s32.totalorder %s92, %s106
      %p108 = scmp.eq.s32.totalorder %s33, 0
      %p109 = por %p107, %p108
      %s110 = ssub.s32 %s34, %s46
      %s111 = ssub.s32 %s35, %s42
      %s112 = sor.u32 %s110, %s111
      %p113 = scmp.eq.s32.totalorder %s112, 0
      %s115 = sadd.s32 %s114, 1
      %s116 = scalar_select %p113, %s114, %s115
      %p119 = pneg %p113
      %p120 = scmp.eq.s32.totalorder %s27, 1
      %p121 = por %p119, %p120
      %p122 = scmp.ne.s32.totalorder %s114, %s117
      %p123 = scmp.eq.s32.totalorder %s27, 0
      %p124 = por %p122, %p123
      %p125 = scmp.ne.s32.totalorder %s114, %s117
      %p126 = scmp.eq.s32.totalorder %s32, 1
      %p127 = por %p125, %p126
      %p128 = scmp.ne.s32.totalorder %s117, %s118
      %p129 = scmp.eq.s32.totalorder %s32, 0
      %p130 = por %p128, %p129
      %p131 = scmp.ne.s32.totalorder %s117, %s118
      %p132 = scmp.eq.s32.totalorder %s33, 1
      %p133 = por %p131, %p132
      %p135 = scmp.ne.s32.totalorder %s118, %s134
      %p136 = scmp.eq.s32.totalorder %s33, 0
      %p137 = por %p135, %p136
      %s138 = ssub.s32 %s34, %s46
      %s139 = ssub.s32 %s35, %s42
      %s140 = sor.u32 %s138, %s139
      %p141 = scmp.eq.s32.totalorder %s140, 0
      %s143 = sadd.s32 %s142, 1
      %s144 = scalar_select %p141, %s142, %s143
      %p147 = pneg %p141
      %p148 = scmp.eq.s32.totalorder %s27, 1
      %p149 = por %p147, %p148
      %p150 = scmp.ne.s32.totalorder %s142, %s145
      %p151 = scmp.eq.s32.totalorder %s27, 0
      %p152 = por %p150, %p151
      %p153 = scmp.ne.s32.totalorder %s142, %s145
      %p154 = scmp.eq.s32.totalorder %s32, 1
      %p155 = por %p153, %p154
      %p156 = scmp.ne.s32.totalorder %s145, %s146
      %p157 = scmp.eq.s32.totalorder %s32, 0
      %p158 = por %p156, %p157
      %p159 = scmp.ne.s32.totalorder %s145, %s146
      %p160 = scmp.eq.s32.totalorder %s33, 1
      %p161 = por %p159, %p160
      %p163 = scmp.ne.s32.totalorder %s146, %s162
      %p164 = scmp.eq.s32.totalorder %s33, 0
      %p165 = por %p163, %p164
      %s166 = ssub.s32 %s34, %s46
      %s167 = ssub.s32 %s35, %s42
      %s168 = sor.u32 %s166, %s167
      %p169 = scmp.eq.s32.totalorder %s168, 0
      %s171 = sadd.s32 %s170, 1
      %s172 = scalar_select %p169, %s170, %s171
      %p175 = pneg %p169
      %p176 = scmp.eq.s32.totalorder %s27, 1
      %p177 = por %p175, %p176
      %p178 = scmp.ne.s32.totalorder %s170, %s173
      %p179 = scmp.eq.s32.totalorder %s27, 0
      %p180 = por %p178, %p179
      %p181 = scmp.ne.s32.totalorder %s170, %s173
      %p182 = scmp.eq.s32.totalorder %s32, 1
      %p183 = por %p181, %p182
      %p184 = scmp.ne.s32.totalorder %s173, %s174
      %p185 = scmp.eq.s32.totalorder %s32, 0
      %p186 = por %p184, %p185
      %p187 = scmp.ne.s32.totalorder %s173, %s174
      %p188 = scmp.eq.s32.totalorder %s33, 1
      %p189 = por %p187, %p188
      %p191 = scmp.ne.s32.totalorder %s174, %s190
      %p192 = scmp.eq.s32.totalorder %s33, 0
      %p193 = por %p191, %p192
      %s194 = ssub.s32 %s34, %s46
      %s195 = ssub.s32 %s35, %s42
      %s196 = sor.u32 %s194, %s195
      %p197 = scmp.eq.s32.totalorder %s196, 0
      %s199 = sadd.s32 %s198, 1
      %s200 = scalar_select %p197, %s198, %s199
      %p203 = pneg %p197
      %p204 = scmp.eq.s32.totalorder %s27, 1
      %p205 = por %p203, %p204
      %p206 = scmp.ne.s32.totalorder %s198, %s201
      %p207 = scmp.eq.s32.totalorder %s27, 0
      %p208 = por %p206, %p207
      %p209 = scmp.ne.s32.totalorder %s198, %s201
      %p210 = scmp.eq.s32.totalorder %s32, 1
      %p211 = por %p209, %p210
      %p212 = scmp.ne.s32.totalorder %s201, %s202
      %p213 = scmp.eq.s32.totalorder %s32, 0
      %p214 = por %p212, %p213
      %p215 = scmp.ne.s32.totalorder %s201, %s202
      %p216 = scmp.eq.s32.totalorder %s33, 1
      %p217 = por %p215, %p216
      %p219 = scmp.ne.s32.totalorder %s202, %s218
      %p220 = scmp.eq.s32.totalorder %s33, 0
      %p221 = por %p219, %p220
      %p222 = scmp.le.s32.totalorder 1, %s27
      %p223 = scmp.lt.s32.totalorder %s27, 3
      %p224 = pnand %p222, %p223
      %p225 = pneg %p224
      // Predicated region
      $region9: #{tpu_custom_call.1} parent=5 // pred_check
        _
      $region10: #{tpu_custom_call.1} parent=5 // pred_check_branch
        %227 = sbr.rel (%p224) target = $region12
      $region11: #{tpu_custom_call.1} parent=5 // pred_region
        %s228 = ssub.s32 %s27, 1
        // Predicated region
        $region13: #{tpu_custom_call.1} parent=11 // pred_check
          %p229 = pneg %p60
        $region14: #{tpu_custom_call.1} parent=11 // pred_check_branch
          %231 = sbr.rel (%p229) target = $region16
        $region15: #{tpu_custom_call.1} parent=11 // pred_region
          %233 = vsyncadd [#allocation5], 0
          %s235 = sshll.u32 %s0, 4
          %s236 = int_to_ptr.hbm [resolvable:$true] %s235
          %238 = dma.hbm_to_smem %s236, 32, [#allocation2], [#allocation5]
        $region16: #{tpu_custom_call.1} parent=11 // pred_fallthru
          _
        // Predicated region
        $region17: #{tpu_custom_call.1} parent=11 // pred_check
          %p239 = pneg %p81
        $region18: #{tpu_custom_call.1} parent=11 // pred_check_branch
          %241 = sbr.rel (%p239) target = $region20
        $region19: #{tpu_custom_call.1} parent=11 // pred_region
          %243 = vsyncadd [#allocation7], 0
          %s245 = sshll.u32 %s1, 4
          %s246 = int_to_ptr.hbm [resolvable:$true] %s245
          %248 = dma.hbm_to_smem %s246, 64, [#allocation6], [#allocation7]
        $region20: #{tpu_custom_call.1} parent=11 // pred_fallthru
          _
        // Predicated region
        $region21: #{tpu_custom_call.1} parent=11 // pred_check
          %p249 = pneg %p102
        $region22: #{tpu_custom_call.1} parent=11 // pred_check_branch
          %251 = sbr.rel (%p249) target = $region24
        $region23: #{tpu_custom_call.1} parent=11 // pred_region
          %253 = vsyncadd [#allocation7], 0
          %s255 = sshll.u32 %s2, 4
          %s256 = int_to_ptr.hbm [resolvable:$true] %s255
          %258 = dma.hbm_to_smem %s256, 32, [#allocation8], [#allocation7]
        $region24: #{tpu_custom_call.1} parent=11 // pred_fallthru
          _
      $region12: #{tpu_custom_call.1} parent=5 // pred_fallthru
        _
      %p259 = scmp.lt.s32.totalorder %s27, 2
      // Predicated region
      $region25: #{tpu_custom_call.1} parent=5 // pred_check
        %p260 = pneg %p259
      $region26: #{tpu_custom_call.1} parent=5 // pred_check_branch
        %262 = sbr.rel (%p260) target = $region28
      $region27: #{tpu_custom_call.1} parent=5 // pred_region
        // Predicated region
        $region29: #{tpu_custom_call.1} parent=27 // pred_check
          %p263 = pneg %p124
        $region30: #{tpu_custom_call.1} parent=27 // pred_check_branch
          %265 = sbr.rel (%p263) target = $region32
        $region31: #{tpu_custom_call.1} parent=27 // pred_region
          %s266 = sand.u32 %s114, 1
          %s267 = scalar_lea.sflag [#allocation3], %s266
          %s268 = sand.u32 %s114, 1
          %s269 = smul.addr %s268, 32
          %s270 = scalar_lea.vmem [#allocation9], %s269
          %s271 = smul.u32 8, %s35
          %273 = vsyncadd %s267, 0
          %s274 = smul.addr %s34, 8
          %s275 = sadd.s32 %s271, %s274
          %s276 = smul.addr %s275, 4
          %s277 = scalar_lea.hbm %s3, %s276
          %s279 = sshll.u32 %s277, 4
          %s280 = int_to_ptr.hbm [resolvable:$true] %s279
          %s281 = sshll.u32 %s270, 4
          %s282 = int_to_ptr.vmem [resolvable:$true] %s281
          %284 = dma.hbm_to_vmem [thread:$0]  %s280, 512, %s282, %s267
        $region32: #{tpu_custom_call.1} parent=27 // pred_fallthru
          _
        // Predicated region
        $region33: #{tpu_custom_call.1} parent=27 // pred_check
          %p285 = pneg %p152
        $region34: #{tpu_custom_call.1} parent=27 // pred_check_branch
          %287 = sbr.rel (%p285) target = $region36
        $region35: #{tpu_custom_call.1} parent=27 // pred_region
          %s288 = sand.u32 %s142, 1
          %s289 = scalar_lea.sflag [#allocation11], %s288
          %s290 = sand.u32 %s142, 1
          %s291 = smul.addr %s290, 32
          %s292 = scalar_lea.vmem [#allocation10], %s291
          %s293 = smul.u32 8, %s35
          %295 = vsyncadd %s289, 0
          %s296 = smul.addr %s34, 8
          %s297 = sadd.s32 %s293, %s296
          %s298 = smul.addr %s297, 4
          %s299 = scalar_lea.hbm %s4, %s298
          %s301 = sshll.u32 %s299, 4
          %s302 = int_to_ptr.hbm [resolvable:$true] %s301
          %s303 = sshll.u32 %s292, 4
          %s304 = int_to_ptr.vmem [resolvable:$true] %s303
          %306 = dma.hbm_to_vmem [thread:$0]  %s302, 512, %s304, %s289
        $region36: #{tpu_custom_call.1} parent=27 // pred_fallthru
          _
      $region28: #{tpu_custom_call.1} parent=5 // pred_fallthru
        _
      %p307 = scmp.le.s32.totalorder 1, %s27
      %p308 = scmp.lt.s32.totalorder %s27, 3
      %p309 = pnand %p307, %p308
      %p310 = pneg %p309
      // Predicated region
      $region37: #{tpu_custom_call.1} parent=5 // pred_check
        _
      $region38: #{tpu_custom_call.1} parent=5 // pred_check_branch
        %312 = sbr.rel (%p309) target = $region40
      $region39: #{tpu_custom_call.1} parent=5 // pred_region
        %s313 = ssub.s32 %s27, 1
        // Predicated region
        $region41: #{tpu_custom_call.1} parent=39 // pred_check
          %p314 = pneg %p60
        $region42: #{tpu_custom_call.1} parent=39 // pred_check_branch
          %316 = sbr.rel (%p314) target = $region44
        $region43: #{tpu_custom_call.1} parent=39 // pred_region
          %318 = dma.done [#allocation5], 32
        $region44: #{tpu_custom_call.1} parent=39 // pred_fallthru
          _
        // Predicated region
        $region45: #{tpu_custom_call.1} parent=39 // pred_check
          %p319 = pneg %p81
        $region46: #{tpu_custom_call.1} parent=39 // pred_check_branch
          %321 = sbr.rel (%p319) target = $region48
        $region47: #{tpu_custom_call.1} parent=39 // pred_region
          %323 = dma.done [#allocation7], 64
        $region48: #{tpu_custom_call.1} parent=39 // pred_fallthru
          _
        // Predicated region
        $region49: #{tpu_custom_call.1} parent=39 // pred_check
          %p324 = pneg %p102
        $region50: #{tpu_custom_call.1} parent=39 // pred_check_branch
          %326 = sbr.rel (%p324) target = $region52
        $region51: #{tpu_custom_call.1} parent=39 // pred_region
          %328 = dma.done [#allocation7], 32
        $region52: #{tpu_custom_call.1} parent=39 // pred_fallthru
          _
        %s329 = sand.u32 %s117, 1
        %s330 = scalar_lea.sflag [#allocation3], %s329
        %s331 = sand.u32 %s117, 1
        %s332 = smul.addr %s331, 32
        %s333 = scalar_lea.vmem [#allocation9], %s332
        // Predicated region
        $region53: #{tpu_custom_call.1} parent=39 // pred_check
          %p334 = pneg %p130
        $region54: #{tpu_custom_call.1} parent=39 // pred_check_branch
          %336 = sbr.rel (%p334) target = $region56
        $region55: #{tpu_custom_call.1} parent=39 // pred_region
          %338 = dma.done %s330, 512
        $region56: #{tpu_custom_call.1} parent=39 // pred_fallthru
          _
        %s339 = sand.u32 %s145, 1
        %s340 = scalar_lea.sflag [#allocation11], %s339
        %s341 = sand.u32 %s145, 1
        %s342 = smul.addr %s341, 32
        %s343 = scalar_lea.vmem [#allocation10], %s342
        // Predicated region
        $region57: #{tpu_custom_call.1} parent=39 // pred_check
          %p344 = pneg %p158
        $region58: #{tpu_custom_call.1} parent=39 // pred_check_branch
          %346 = sbr.rel (%p344) target = $region60
        $region59: #{tpu_custom_call.1} parent=39 // pred_region
          %348 = dma.done %s340, 512
        $region60: #{tpu_custom_call.1} parent=39 // pred_fallthru
          _
        %349 = sfence
        %p350 = pneg %p60
        %p351 = pneg %p57
        %p352 = pneg %p81
        %p353 = pneg %p78
        %p354 = pneg %p102
        %p355 = pneg %p99
        %s356 = sand.u32 %s117, 1
        %s357 = scalar_lea.sflag [#allocation3], %s356
        %s358 = sand.u32 %s117, 1
        %s359 = smul.addr %s358, 32
        %s360 = scalar_lea.vmem [#allocation9], %s359
        %p361 = pneg %p130
        %p362 = pneg %p127
        %s363 = sand.u32 %s145, 1
        %s364 = scalar_lea.sflag [#allocation11], %s363
        %s365 = sand.u32 %s145, 1
        %s366 = smul.addr %s365, 32
        %s367 = scalar_lea.vmem [#allocation10], %s366
        %p368 = pneg %p158
        %p369 = pneg %p155
        %p370 = pneg %p186
        %p371 = pneg %p183
        %s372 = sand.u32 %s173, 1
        %s373 = scalar_lea.sflag [#allocation4], %s372
        %s374 = sand.u32 %s173, 1
        %s375 = smul.addr %s374, 32
        %s376 = scalar_lea.vmem [#allocation12], %s375
        %p377 = pneg %p214
        %p378 = pneg %p211
        %s379 = sand.u32 %s201, 1
        %s380 = scalar_lea.sflag [#allocation14], %s379
        %s381 = sand.u32 %s201, 1
        %s382 = smul.addr %s381, 8
        %s383 = scalar_lea.vmem [#allocation13], %s382
        %s384 = smul.u32 8, %s37
        %s385 = smul.u32 8, %s37
        %s386 = smul.u32 8, %s37
        %s387 = smul.u32 %s36, 128
        %s388 = sld [smem:[#allocation2 + %s387]]
        %s389 = sadd.s32 %s387, 1
        %s390 = sld [smem:[#allocation2 + %s389]]
        %s391 = sadd.s32 %s387, 2
        %s392 = sld [smem:[#allocation2 + %s391]]
        %s393 = sadd.s32 %s387, 3
        %s394 = sld [smem:[#allocation2 + %s393]]
        %v395 = vld [vmem:[%s333] sm:$0xff]
        %v396 = vld [vmem:[%s333 + $0x8] sm:$0xff]
        %v397 = vld [vmem:[%s333 + $0x10] sm:$0xff]
        %v398 = vld [vmem:[%s333 + $0x18] sm:$0xff]
        %v399 = vld [vmem:[%s343] sm:$0xff]
        %v400 = vld [vmem:[%s343 + $0x8] sm:$0xff]
        %v401 = vld [vmem:[%s343 + $0x10] sm:$0xff]
        %v402 = vld [vmem:[%s343 + $0x18] sm:$0xff]
        %v403 = vstv %s388
        %v404 = vmul.f32 %v403, %v395
        %v405 = vmul.f32 %v403, %v396
        %v406 = vmul.f32 %v403, %v397
        %v407 = vmul.f32 %v403, %v398
        %v408 = vstv %s390
        %v409 = vmul.f32 %v408, %v399
        %v410 = vmul.f32 %v408, %v400
        %v411 = vmul.f32 %v408, %v401
        %v412 = vmul.f32 %v408, %v402
        %v413 = vadd.f32 %v404, %v409
        %v414 = vadd.f32 %v405, %v410
        %v415 = vadd.f32 %v406, %v411
        %v416 = vadd.f32 %v407, %v412
        %s417 = sld [smem:[#allocation6]]
        %v418 = vstv %s417
        %v419 = vmul.f32 %v413, %v418
        %v420 = vmul.f32 %v414, %v418
        %v421 = vmul.f32 %v415, %v418
        %v422 = vmul.f32 %v416, %v418
        %s423 = sld [smem:[#allocation6 + $0x1]]
        %v424 = vstv %s423
        %v425 = vmul.f32 %v413, %v424
        %v426 = vmul.f32 %v414, %v424
        %v427 = vmul.f32 %v415, %v424
        %v428 = vmul.f32 %v416, %v424
        %v433 = vrot.slane %v425, 5
        %v434 = vrot.slane %v433, 4
        %v435 = vrot.slane %v426, 5
        %v436 = vrot.slane %v435, 4
        %v437 = vrot.slane %v427, 5
        %v438 = vrot.slane %v437, 4
        %v439 = vrot.slane %v428, 5
        %v440 = vrot.slane %v439, 4
        %v445 = vadd.f32 %v419, %v434
        %v446 = vadd.f32 %v420, %v436
        %v447 = vadd.f32 %v421, %v438
        %v448 = vadd.f32 %v422, %v440
        %s449 = sld [smem:[#allocation6 + $0x2]]
        %v450 = vstv %s449
        %v451 = vmul.f32 %v413, %v450
        %v452 = vmul.f32 %v414, %v450
        %v453 = vmul.f32 %v415, %v450
        %v454 = vmul.f32 %v416, %v450
        %v459 = vrot.slane %v451, 6
        %v460 = vrot.slane %v459, 4
        %v461 = vrot.slane %v452, 6
        %v462 = vrot.slane %v461, 4
        %v463 = vrot.slane %v453, 6
        %v464 = vrot.slane %v463, 4
        %v465 = vrot.slane %v454, 6
        %v466 = vrot.slane %v465, 4
        %v471 = vadd.f32 %v445, %v460
        %v472 = vadd.f32 %v446, %v462
        %v473 = vadd.f32 %v447, %v464
        %v474 = vadd.f32 %v448, %v466
        %s475 = sld [smem:[#allocation6 + $0x3]]
        %v476 = vstv %s475
        %v477 = vmul.f32 %v413, %v476
        %v478 = vmul.f32 %v414, %v476
        %v479 = vmul.f32 %v415, %v476
        %v480 = vmul.f32 %v416, %v476
        %v485 = vrot.slane %v477, 7
        %v486 = vrot.slane %v485, 4
        %v487 = vrot.slane %v478, 7
        %v488 = vrot.slane %v487, 4
        %v489 = vrot.slane %v479, 7
        %v490 = vrot.slane %v489, 4
        %v491 = vrot.slane %v480, 7
        %v492 = vrot.slane %v491, 4
        %v497 = vadd.f32 %v471, %v486
        %v498 = vadd.f32 %v472, %v488
        %v499 = vadd.f32 %v473, %v490
        %v500 = vadd.f32 %v474, %v492
        %s501 = sld [smem:[#allocation8 + %s387]]
        %v502 = vstv %s501
        %v503 = vadd.f32 %v497, %v502
        %v504 = vadd.f32 %v498, %v502
        %v505 = vadd.f32 %v499, %v502
        %v506 = vadd.f32 %v500, %v502
        %s507 = sld [smem:[#allocation6 + $0x80]]
        %v508 = vstv %s507
        %v509 = vmul.f32 %v413, %v508
        %v510 = vmul.f32 %v414, %v508
        %v511 = vmul.f32 %v415, %v508
        %v512 = vmul.f32 %v416, %v508
        %s513 = sld [smem:[#allocation6 + $0x81]]
        %v514 = vstv %s513
        %v515 = vmul.f32 %v413, %v514
        %v516 = vmul.f32 %v414, %v514
        %v517 = vmul.f32 %v415, %v514
        %v518 = vmul.f32 %v416, %v514
        %v523 = vrot.slane %v515, 5
        %v524 = vrot.slane %v523, 4
        %v525 = vrot.slane %v516, 5
        %v526 = vrot.slane %v525, 4
        %v527 = vrot.slane %v517, 5
        %v528 = vrot.slane %v527, 4
        %v529 = vrot.slane %v518, 5
        %v530 = vrot.slane %v529, 4
        %v535 = vadd.f32 %v509, %v524
        %v536 = vadd.f32 %v510, %v526
        %v537 = vadd.f32 %v511, %v528
        %v538 = vadd.f32 %v512, %v530
        %s539 = sld [smem:[#allocation6 + $0x82]]
        %v540 = vstv %s539
        %v541 = vmul.f32 %v413, %v540
        %v542 = vmul.f32 %v414, %v540
        %v543 = vmul.f32 %v415, %v540
        %v544 = vmul.f32 %v416, %v540
        %v549 = vrot.slane %v541, 6
        %v550 = vrot.slane %v549, 4
        %v551 = vrot.slane %v542, 6
        %v552 = vrot.slane %v551, 4
        %v553 = vrot.slane %v543, 6
        %v554 = vrot.slane %v553, 4
        %v555 = vrot.slane %v544, 6
        %v556 = vrot.slane %v555, 4
        %v561 = vadd.f32 %v535, %v550
        %v562 = vadd.f32 %v536, %v552
        %v563 = vadd.f32 %v537, %v554
        %v564 = vadd.f32 %v538, %v556
        %s565 = sld [smem:[#allocation6 + $0x83]]
        %v566 = vstv %s565
        %v567 = vmul.f32 %v413, %v566
        %v568 = vmul.f32 %v414, %v566
        %v569 = vmul.f32 %v415, %v566
        %v570 = vmul.f32 %v416, %v566
        %v575 = vrot.slane %v567, 7
        %v576 = vrot.slane %v575, 4
        %v577 = vrot.slane %v568, 7
        %v578 = vrot.slane %v577, 4
        %v579 = vrot.slane %v569, 7
        %v580 = vrot.slane %v579, 4
        %v581 = vrot.slane %v570, 7
        %v582 = vrot.slane %v581, 4
        %v587 = vadd.f32 %v561, %v576
        %v588 = vadd.f32 %v562, %v578
        %v589 = vadd.f32 %v563, %v580
        %v590 = vadd.f32 %v564, %v582
        %s591 = sld [smem:[#allocation8 + %s389]]
        %v592 = vstv %s591
        %v593 = vadd.f32 %v587, %v592
        %v594 = vadd.f32 %v588, %v592
        %v595 = vadd.f32 %v589, %v592
        %v596 = vadd.f32 %v590, %v592
        %s597 = sld [smem:[#allocation6 + $0x100]]
        %v598 = vstv %s597
        %v599 = vmul.f32 %v413, %v598
        %v600 = vmul.f32 %v414, %v598
        %v601 = vmul.f32 %v415, %v598
        %v602 = vmul.f32 %v416, %v598
        %s603 = sld [smem:[#allocation6 + $0x101]]
        %v604 = vstv %s603
        %v605 = vmul.f32 %v413, %v604
        %v606 = vmul.f32 %v414, %v604
        %v607 = vmul.f32 %v415, %v604
        %v608 = vmul.f32 %v416, %v604
        %v613 = vrot.slane %v605, 5
        %v614 = vrot.slane %v613, 4
        %v615 = vrot.slane %v606, 5
        %v616 = vrot.slane %v615, 4
        %v617 = vrot.slane %v607, 5
        %v618 = vrot.slane %v617, 4
        %v619 = vrot.slane %v608, 5
        %v620 = vrot.slane %v619, 4
        %v625 = vadd.f32 %v599, %v614
        %v626 = vadd.f32 %v600, %v616
        %v627 = vadd.f32 %v601, %v618
        %v628 = vadd.f32 %v602, %v620
        %s629 = sld [smem:[#allocation6 + $0x102]]
        %v630 = vstv %s629
        %v631 = vmul.f32 %v413, %v630
        %v632 = vmul.f32 %v414, %v630
        %v633 = vmul.f32 %v415, %v630
        %v634 = vmul.f32 %v416, %v630
        %v639 = vrot.slane %v631, 6
        %v640 = vrot.slane %v639, 4
        %v641 = vrot.slane %v632, 6
        %v642 = vrot.slane %v641, 4
        %v643 = vrot.slane %v633, 6
        %v644 = vrot.slane %v643, 4
        %v645 = vrot.slane %v634, 6
        %v646 = vrot.slane %v645, 4
        %v651 = vadd.f32 %v625, %v640
        %v652 = vadd.f32 %v626, %v642
        %v653 = vadd.f32 %v627, %v644
        %v654 = vadd.f32 %v628, %v646
        %s655 = sld [smem:[#allocation6 + $0x103]]
        %v656 = vstv %s655
        %v657 = vmul.f32 %v413, %v656
        %v658 = vmul.f32 %v414, %v656
        %v659 = vmul.f32 %v415, %v656
        %v660 = vmul.f32 %v416, %v656
        %v665 = vrot.slane %v657, 7
        %v666 = vrot.slane %v665, 4
        %v667 = vrot.slane %v658, 7
        %v668 = vrot.slane %v667, 4
        %v669 = vrot.slane %v659, 7
        %v670 = vrot.slane %v669, 4
        %v671 = vrot.slane %v660, 7
        %v672 = vrot.slane %v671, 4
        %v677 = vadd.f32 %v651, %v666
        %v678 = vadd.f32 %v652, %v668
        %v679 = vadd.f32 %v653, %v670
        %v680 = vadd.f32 %v654, %v672
        %s681 = sld [smem:[#allocation8 + %s391]]
        %v682 = vstv %s681
        %v683 = vadd.f32 %v677, %v682
        %v684 = vadd.f32 %v678, %v682
        %v685 = vadd.f32 %v679, %v682
        %v686 = vadd.f32 %v680, %v682
        %s687 = sld [smem:[#allocation6 + $0x180]]
        %v688 = vstv %s687
        %v689 = vmul.f32 %v413, %v688
        %v690 = vmul.f32 %v414, %v688
        %v691 = vmul.f32 %v415, %v688
        %v692 = vmul.f32 %v416, %v688
        %s693 = sld [smem:[#allocation6 + $0x181]]
        %v694 = vstv %s693
        %v695 = vmul.f32 %v413, %v694
        %v696 = vmul.f32 %v414, %v694
        %v697 = vmul.f32 %v415, %v694
        %v698 = vmul.f32 %v416, %v694
        %v703 = vrot.slane %v695, 5
        %v704 = vrot.slane %v703, 4
        %v705 = vrot.slane %v696, 5
        %v706 = vrot.slane %v705, 4
        %v707 = vrot.slane %v697, 5
        %v708 = vrot.slane %v707, 4
        %v709 = vrot.slane %v698, 5
        %v710 = vrot.slane %v709, 4
        %v715 = vadd.f32 %v689, %v704
        %v716 = vadd.f32 %v690, %v706
        %v717 = vadd.f32 %v691, %v708
        %v718 = vadd.f32 %v692, %v710
        %s719 = sld [smem:[#allocation6 + $0x182]]
        %v720 = vstv %s719
        %v721 = vmul.f32 %v413, %v720
        %v722 = vmul.f32 %v414, %v720
        %v723 = vmul.f32 %v415, %v720
        %v724 = vmul.f32 %v416, %v720
        %v729 = vrot.slane %v721, 6
        %v730 = vrot.slane %v729, 4
        %v731 = vrot.slane %v722, 6
        %v732 = vrot.slane %v731, 4
        %v733 = vrot.slane %v723, 6
        %v734 = vrot.slane %v733, 4
        %v735 = vrot.slane %v724, 6
        %v736 = vrot.slane %v735, 4
        %v741 = vadd.f32 %v715, %v730
        %v742 = vadd.f32 %v716, %v732
        %v743 = vadd.f32 %v717, %v734
        %v744 = vadd.f32 %v718, %v736
        %s745 = sld [smem:[#allocation6 + $0x183]]
        %v746 = vstv %s745
        %v747 = vmul.f32 %v413, %v746
        %v748 = vmul.f32 %v414, %v746
        %v749 = vmul.f32 %v415, %v746
        %v750 = vmul.f32 %v416, %v746
        %v755 = vrot.slane %v747, 7
        %v756 = vrot.slane %v755, 4
        %v757 = vrot.slane %v748, 7
        %v758 = vrot.slane %v757, 4
        %v759 = vrot.slane %v749, 7
        %v760 = vrot.slane %v759, 4
        %v761 = vrot.slane %v750, 7
        %v762 = vrot.slane %v761, 4
        %v767 = vadd.f32 %v741, %v756
        %v768 = vadd.f32 %v742, %v758
        %v769 = vadd.f32 %v743, %v760
        %v770 = vadd.f32 %v744, %v762
        %s771 = sld [smem:[#allocation8 + %s393]]
        %v772 = vstv %s771
        %v773 = vadd.f32 %v767, %v772
        %v774 = vadd.f32 %v768, %v772
        %v775 = vadd.f32 %v769, %v772
        %v776 = vadd.f32 %v770, %v772
        %v781 = vperm.slane %v503, 0
        %v782 = vperm.slane %v503, 4
        %v783 = vperm.slane %v504, 0
        %v784 = vperm.slane %v504, 4
        %v785 = vperm.slane %v505, 0
        %v786 = vperm.slane %v505, 4
        %v787 = vperm.slane %v506, 0
        %v788 = vperm.slane %v506, 4
        %v801 = vperm.slane %v593, 0
        %v802 = vperm.slane %v593, 4
        %v803 = vperm.slane %v594, 0
        %v804 = vperm.slane %v594, 4
        %v805 = vperm.slane %v595, 0
        %v806 = vperm.slane %v595, 4
        %v807 = vperm.slane %v596, 0
        %v808 = vperm.slane %v596, 4
        %v821 = vperm.slane %v683, 0
        %v822 = vperm.slane %v683, 4
        %v823 = vperm.slane %v684, 0
        %v824 = vperm.slane %v684, 4
        %v825 = vperm.slane %v685, 0
        %v826 = vperm.slane %v685, 4
        %v827 = vperm.slane %v686, 0
        %v828 = vperm.slane %v686, 4
        %v841 = vperm.slane %v773, 0
        %v842 = vperm.slane %v773, 4
        %v843 = vperm.slane %v774, 0
        %v844 = vperm.slane %v774, 4
        %v845 = vperm.slane %v775, 0
        %v846 = vperm.slane %v775, 4
        %v847 = vperm.slane %v776, 0
        %v848 = vperm.slane %v776, 4
        %vm857 = vcmask 1040384
        %v858 = vsel %vm857, %v781, %v801
        %v859 = vsel %vm857, %v782, %v802
        %v860 = vsel %vm857, %v783, %v803
        %v861 = vsel %vm857, %v784, %v804
        %v862 = vsel %vm857, %v785, %v805
        %v863 = vsel %vm857, %v786, %v806
        %v864 = vsel %vm857, %v787, %v807
        %v865 = vsel %vm857, %v788, %v808
        %vm866 = vcmask 1041408
        %v867 = vsel %vm866, %v858, %v821
        %v868 = vsel %vm866, %v859, %v822
        %v869 = vsel %vm866, %v860, %v823
        %v870 = vsel %vm866, %v861, %v824
        %v871 = vsel %vm866, %v862, %v825
        %v872 = vsel %vm866, %v863, %v826
        %v873 = vsel %vm866, %v864, %v827
        %v874 = vsel %vm866, %v865, %v828
        %vm875 = vcmask 1042432
        %v876 = vsel %vm875, %v867, %v841
        %v877 = vsel %vm875, %v868, %v842
        %v878 = vsel %vm875, %v869, %v843
        %v879 = vsel %vm875, %v870, %v844
        %v880 = vsel %vm875, %v871, %v845
        %v881 = vsel %vm875, %v872, %v846
        %v882 = vsel %vm875, %v873, %v847
        %v883 = vsel %vm875, %v874, %v848
        %v884 = vstv %s392
        %v885 = vmul.f32 %v884, %v413
        %v886 = vmul.f32 %v884, %v414
        %v887 = vmul.f32 %v884, %v415
        %v888 = vmul.f32 %v884, %v416
        %v889 = vstv %s394
        %v890 = vmul.f32 %v889, %v876
        %v891 = vmul.f32 %v889, %v877
        %v892 = vmul.f32 %v889, %v878
        %v893 = vmul.f32 %v889, %v879
        %v894 = vmul.f32 %v889, %v880
        %v895 = vmul.f32 %v889, %v881
        %v896 = vmul.f32 %v889, %v882
        %v897 = vmul.f32 %v889, %v883
        %v906 = vrot.slane %v891, 4
        %v907 = vrot.slane %v893, 4
        %v908 = vrot.slane %v895, 4
        %v909 = vrot.slane %v897, 4
        %vm910 = vcmask 1043456
        %v911 = vsel %vm910, %v890, %v906
        %v912 = vsel %vm910, %v892, %v907
        %v913 = vsel %vm910, %v894, %v908
        %v914 = vsel %vm910, %v896, %v909
        %v919 = vsub.f32 %v885, %v911
        %v920 = vsub.f32 %v886, %v912
        %v921 = vsub.f32 %v887, %v913
        %v922 = vsub.f32 %v888, %v914
        %v923 = vmax.f32 %v919, -1.0
        %v924 = vmax.f32 %v920, -1.0
        %v925 = vmax.f32 %v921, -1.0
        %v926 = vmax.f32 %v922, -1.0
        %v927 = vmin.f32 %v923, 1.0
        %v928 = vmin.f32 %v924, 1.0
        %v929 = vmin.f32 %v925, 1.0
        %v930 = vmin.f32 %v926, 1.0
        %931 = vst [vmem:[%s376] sm:$0xff] %v927
        %932 = vst [vmem:[%s376 + $0x8] sm:$0xff] %v928
        %933 = vst [vmem:[%s376 + $0x10] sm:$0xff] %v929
        %934 = vst [vmem:[%s376 + $0x18] sm:$0xff] %v930
        %v943 = vrot.slane %v877, 4
        %v944 = vrot.slane %v879, 4
        %v945 = vrot.slane %v881, 4
        %v946 = vrot.slane %v883, 4
        %v947 = vsel %vm910, %v876, %v943
        %v948 = vsel %vm910, %v878, %v944
        %v949 = vsel %vm910, %v880, %v945
        %v950 = vsel %vm910, %v882, %v946
        %v955 = vsub.f32 %v399, %v947
        %v956 = vsub.f32 %v400, %v948
        %v957 = vsub.f32 %v401, %v949
        %v958 = vsub.f32 %v402, %v950
        %v959 = vand.u32 2147483647, %v955
        %v960 = vand.u32 2147483647, %v956
        %v961 = vand.u32 2147483647, %v957
        %v962 = vand.u32 2147483647, %v958
        %967 = vst [vmem:[#allocation1] ss:$2 sm:$0xff] %v959
        %s968 = scalar_lea.vmem [#allocation1], 16
        %969 = vst [vmem:[%s968] ss:$2 sm:$0xff] %v960
        %s970 = scalar_lea.vmem [#allocation1], 32
        %971 = vst [vmem:[%s970] ss:$2 sm:$0xff] %v961
        %s972 = scalar_lea.vmem [#allocation1], 48
        %973 = vst [vmem:[%s972] ss:$2 sm:$0xff] %v962
        %v974 = vld.sshfl [vmem:[#allocation1] sm:$0xff pattern:$0x75316420]
        %v975 = vld.sshfl [vmem:[#allocation1 + $0x8] sm:$0xff pattern:$0x75316420]
        %v976 = vld.sshfl [vmem:[#allocation1 + $0x10] sm:$0xff pattern:$0x75316420]
        %v977 = vld.sshfl [vmem:[#allocation1 + $0x18] sm:$0xff pattern:$0x75316420]
        %v978 = vld.sshfl [vmem:[#allocation1 + $0x20] sm:$0xff pattern:$0x75316420]
        %v979 = vld.sshfl [vmem:[#allocation1 + $0x28] sm:$0xff pattern:$0x75316420]
        %v980 = vld.sshfl [vmem:[#allocation1 + $0x30] sm:$0xff pattern:$0x75316420]
        %v981 = vld.sshfl [vmem:[#allocation1 + $0x38] sm:$0xff pattern:$0x75316420]
        %v990 = vsel %vm910, %v974, 0.0
        %v991 = vsel %vm910, %v975, 0.0
        %v992 = vadd.f32 %v990, %v991
        %v993 = vsel %vm910, %v976, 0.0
        %v994 = vadd.f32 %v992, %v993
        %v995 = vsel %vm910, %v977, 0.0
        %v996 = vadd.f32 %v994, %v995
        %v997 = vsel %vm910, %v978, 0.0
        %v998 = vadd.f32 %v996, %v997
        %v999 = vsel %vm910, %v979, 0.0
        %v1000 = vadd.f32 %v998, %v999
        %v1001 = vsel %vm910, %v980, 0.0
        %v1002 = vadd.f32 %v1000, %v1001
        %v1003 = vsel %vm910, %v981, 0.0
        %v1004 = vadd.f32 %v1002, %v1003
        %1005 = vadd.xlane.f32.xlu0 %v1004
        %v1006 = vpop.xlane.xlu0 %1005
        %v1007 = vsel %vm910, %v1006, 0.0
        %v1008 = vrot.slane %v1007, 4
        %v1009 = vadd.f32 %v1007, %v1008
        %v1010 = vrot.slane %v1009, 2
        %v1011 = vadd.f32 %v1009, %v1010
        %v1012 = vrot.slane %v1011, 1
        %v1013 = vadd.f32 %v1011, %v1012
        %1014 = vst [vmem:[%s383] sm:$0xff] %v1013
        %s1015 = sand.u32 %s173, 1
        %s1016 = scalar_lea.sflag [#allocation4], %s1015
        %s1017 = sand.u32 %s173, 1
        %s1018 = smul.addr %s1017, 32
        %s1019 = scalar_lea.vmem [#allocation12], %s1018
        %s1020 = sand.u32 %s201, 1
        %s1021 = scalar_lea.sflag [#allocation14], %s1020
        %s1022 = sand.u32 %s201, 1
        %s1023 = smul.addr %s1022, 8
        %s1024 = scalar_lea.vmem [#allocation13], %s1023
        // Predicated region
        $region61: #{tpu_custom_call.1} parent=39 // pred_check
          %p1025 = pneg %p183
        $region62: #{tpu_custom_call.1} parent=39 // pred_check_branch
          %1027 = sbr.rel (%p1025) target = $region64
        $region63: #{tpu_custom_call.1} parent=39 // pred_region
          %s1028 = smul.u32 8, %s37
          %1030 = vsyncadd %s1016, 0
          %s1031 = smul.addr %s36, 8
          %s1032 = sadd.s32 %s1028, %s1031
          %s1033 = smul.addr %s1032, 4
          %s1034 = scalar_lea.hbm %s5, %s1033
          %s1036 = sshll.u32 %s1019, 4
          %s1037 = int_to_ptr.vmem [resolvable:$true] %s1036
          %s1038 = sshll.u32 %s1034, 4
          %s1039 = int_to_ptr.hbm [resolvable:$true] %s1038
          %1041 = dma.vmem_to_hbm [thread:$0]  %s1037, 512, %s1039, %s1016
        $region64: #{tpu_custom_call.1} parent=39 // pred_fallthru
          _
        // Predicated region
        $region65: #{tpu_custom_call.1} parent=39 // pred_check
          %p1042 = pneg %p211
        $region66: #{tpu_custom_call.1} parent=39 // pred_check_branch
          %1044 = sbr.rel (%p1042) target = $region68
        $region67: #{tpu_custom_call.1} parent=39 // pred_region
          %1046 = vsyncadd %s1021, 0
          %s1047 = sadd.s32 %s37, %s36
          %s1048 = smul.addr %s1047, 8
          %s1049 = scalar_lea.hbm %s6, %s1048
          %s1051 = sshll.u32 %s1024, 4
          %s1052 = int_to_ptr.vmem [resolvable:$true] %s1051
          %s1053 = sshll.u32 %s1049, 4
          %s1054 = int_to_ptr.hbm [resolvable:$true] %s1053
          %1056 = dma.vmem_to_hbm [thread:$0]  %s1052, 128, %s1054, %s1021
        $region68: #{tpu_custom_call.1} parent=39 // pred_fallthru
          _
      $region40: #{tpu_custom_call.1} parent=5 // pred_fallthru
        _
      %p1057 = scmp.le.s32.totalorder 2, %s27
      // Predicated region
      $region69: #{tpu_custom_call.1} parent=5 // pred_check
        %p1058 = pneg %p1057
      $region70: #{tpu_custom_call.1} parent=5 // pred_check_branch
        %1060 = sbr.rel (%p1058) target = $region72
      $region71: #{tpu_custom_call.1} parent=5 // pred_region
        %s1061 = ssub.s32 %s27, 2
        // Predicated region
        $region73: #{tpu_custom_call.1} parent=71 // pred_check
          %p1062 = pneg %p189
        $region74: #{tpu_custom_call.1} parent=71 // pred_check_branch
          %1064 = sbr.rel (%p1062) target = $region76
        $region75: #{tpu_custom_call.1} parent=71 // pred_region
          %s1065 = sand.u32 %s174, 1
          %s1066 = scalar_lea.sflag [#allocation4], %s1065
          %s1067 = sand.u32 %s174, 1
          %s1068 = smul.addr %s1067, 32
          %s1069 = scalar_lea.vmem [#allocation12], %s1068
          %1071 = dma.done %s1066, 512
        $region76: #{tpu_custom_call.1} parent=71 // pred_fallthru
          _
        // Predicated region
        $region77: #{tpu_custom_call.1} parent=71 // pred_check
          %p1072 = pneg %p217
        $region78: #{tpu_custom_call.1} parent=71 // pred_check_branch
          %1074 = sbr.rel (%p1072) target = $region80
        $region79: #{tpu_custom_call.1} parent=71 // pred_region
          %s1075 = sand.u32 %s202, 1
          %s1076 = scalar_lea.sflag [#allocation14], %s1075
          %s1077 = sand.u32 %s202, 1
          %s1078 = smul.addr %s1077, 8
          %s1079 = scalar_lea.vmem [#allocation13], %s1078
          %1081 = dma.done %s1076, 128
        $region80: #{tpu_custom_call.1} parent=71 // pred_fallthru
          _
      $region72: #{tpu_custom_call.1} parent=5 // pred_fallthru
        _
    $region6: #{tpu_custom_call.1} parent=1 // loop_footer
      %s31 = sadd.s32 1, %s27
    $region7: #{tpu_custom_call.1} parent=1 // loop_footer_branch
      %26 = sbr.rel target = $region3
    $region8: #{tpu_custom_call.1} parent=1 // loop_exit
      _
    %1082 = vsyncpa [#allocation3], 1
    %s1083 = scalar_lea.sflag [#allocation3], 1
    %1084 = vsyncpa %s1083, 1
    %1085 = vsyncpa [#allocation11], 1
    %s1086 = scalar_lea.sflag [#allocation11], 1
    %1087 = vsyncpa %s1086, 1
    %1088 = vsyncpa [#allocation4], 1
    %s1089 = scalar_lea.sflag [#allocation4], 1
    %1090 = vsyncpa %s1089, 1
    %1091 = vsyncpa [#allocation14], 1
    %s1092 = scalar_lea.sflag [#allocation14], 1
    %1093 = vsyncpa %s1092, 1
    %1094 = vsyncpa [#allocation5], 1
    %s1095 = scalar_lea.sflag [#allocation5], 1
    %1096 = vsyncpa %s1095, 1
    %1097 = vsyncpa [#allocation7], 1

</llo_original>
